<compile_context>
chip_gen: v6e
topology: v6e:2x2x1
jax: 0.10.0
libtpu: 0.0.40
codegen_flags: <defaults>
</compile_context>

<pallas_src>
import functools

import jax
import jax.numpy as jnp
from jax.experimental import pallas as pl
from jax.experimental.pallas import tpu as pltpu

# Default batch tile: 2048 rows x 384 (lane-padded 360) x 4 B x 2 inputs x
# 2 pipeline buffers ~= 25 MiB -> fits every generation once the scoped VMEM
# limit is raised (see vmem_limit_bytes below).
_TB_DEFAULT = 2048
# Below this, kernel-dispatch overhead dominates and fusion with the producer
# wins; let XLA handle it.
_SMALL_BATCH = 512


def _sublane_multiple(dtype) -> int:
    """Minimum sublane multiple for a sub-extent second-minor block dim."""
    itemsize = jnp.dtype(dtype).itemsize
    return max(8, 32 // max(itemsize, 1))   # f32->8, bf16->16, int8/fp8->32


def _round_up(x: int, m: int) -> int:
    return ((x + m - 1) // m) * m


def _viewpoint_loss_kernel(preds_ref, labels_ref, out_ref, *,
                           batch: int, tile: int, mask_tail: bool):
    # (TB, C) tile; accumulate in f32 regardless of input dtype.
    x = preds_ref[...].astype(jnp.float32)
    lab = labels_ref[...].astype(jnp.float32)

    # Numerically-stable log-softmax pieces along the class (lane) axis.
    # Only 3 cross-lane reductions per tile: max, sum(exp), and the fused
    # sum(lab * (z - lse)) = sum(lab * logp).
    m = jnp.max(x, axis=1, keepdims=True)                        # (TB, 1)
    z = x - m                                                    # (TB, C)
    lse = jnp.log(jnp.sum(jnp.exp(z), axis=1, keepdims=True))    # (TB, 1)
    per_row = jnp.sum(lab * (z - lse), axis=1, keepdims=True)    # (TB, 1)

    if mask_tail:
        # Zero only the (TB, 1) per-row results past the true batch size.
        # All math above is strictly row-local, and jnp.where discards any
        # NaN/Inf produced by the garbage rows of the padded last tile.
        row = pl.program_id(0) * tile + jax.lax.broadcasted_iota(
            jnp.int32, (tile, 1), 0)
        per_row = jnp.where(row < batch, per_row, 0.0)

    # Partial sum for this batch tile, splatted into a compliant lane-dense
    # (1, 8, 128) output block (the wrapper reads [:, 0, 0]).
    psum = jnp.sum(per_row, axis=0, keepdims=True)               # (1, 1)
    out_ref[...] = jnp.broadcast_to(psum.reshape(1, 1, 1), (1, 8, 128))


def viewpoint_loss(preds: jax.Array, labels: jax.Array, mean: bool = True, *,
                   tile_batch: int | None = None,
                   use_pallas: bool | None = None) -> jax.Array:
    """Pallas equivalent of ViewpointLoss(mean).forward(preds, labels)."""
    assert preds.shape == labels.shape and preds.ndim == 2
    B, C = preds.shape

    if use_pallas is None:
        use_pallas = B >= _SMALL_BATCH
    if not use_pallas:
        # Tiny batches: a standalone Pallas dispatch is slower than a fused
        # XLA epilogue on every TPU generation.
        lab = labels.astype(jnp.float32)
        logp = jax.nn.log_softmax(preds.astype(jnp.float32), axis=1)
        total = jnp.sum(lab * logp)
        scale = (1.0 / C) if mean else 1.0
        return -total * scale

    # Sub-extent batch tiles must be a multiple of the sublane tiling for the
    # *narrowest* input dtype (8 for 32-bit, 16 for 16-bit, 32 for 8-bit).
    mult = max(_sublane_multiple(preds.dtype), _sublane_multiple(labels.dtype))

    tb = tile_batch if tile_batch is not None else _TB_DEFAULT
    tb = max(mult, (tb // mult) * mult)
    if B <= tb:
        if B >= 2 * _SMALL_BATCH:
            # Guarantee >= 2 "parallel" grid blocks so both v7x TensorCores
            # share the HBM bandwidth (harmless extra step on v5e/v6e).
            tb = _round_up(pl.cdiv(B, 2), mult)
        else:
            tb = B   # block == full extent: no sublane-multiple constraint
    num_blocks = pl.cdiv(B, tb)
    mask_tail = (B % tb) != 0

    kernel = functools.partial(_viewpoint_loss_kernel,
                               batch=B, tile=tb, mask_tail=mask_tail)

    in_bytes = B * C * (jnp.dtype(preds.dtype).itemsize +
                        jnp.dtype(labels.dtype).itemsize)
    out_bytes = num_blocks * 8 * 128 * 4
    cost = pl.CostEstimate(flops=8 * B * C,
                           transcendentals=B * C,
                           bytes_accessed=in_bytes + out_bytes)

    partials = pl.pallas_call(
        kernel,
        out_shape=jax.ShapeDtypeStruct((num_blocks, 8, 128), jnp.float32),
        grid=(num_blocks,),
        in_specs=[
            pl.BlockSpec((tb, C), lambda i: (i, 0)),
            pl.BlockSpec((tb, C), lambda i: (i, 0)),
        ],
        out_specs=pl.BlockSpec((1, 8, 128), lambda i: (i, 0, 0)),
        compiler_params=pltpu.CompilerParams(
            dimension_semantics=("parallel",),
            # 2048-row f32 tiles need ~25 MiB double-buffered; raise the scoped
            # limit (v5e default is 16 MiB) while leaving headroom on v7x.
            vmem_limit_bytes=48 << 20),
        cost_estimate=cost,
    )(preds, labels)

    total = jnp.sum(partials[:, 0, 0])
    scale = (1.0 / C) if mean else 1.0   # fold mean(1)'s /C and the negation here
    return -total * scale


class ViewpointLoss:
    """Mirror of the PyTorch module (no parameters)."""

    def __init__(self, mean: bool = True):
        self.mean = mean

    def __call__(self, preds, labels):
        return viewpoint_loss(preds, labels, self.mean)


def _reference(preds, labels, mean=True):
    labels = labels.astype(jnp.float32)
    logp = jax.nn.log_softmax(preds.astype(jnp.float32), axis=1)
    if mean:
        return -(labels * logp).mean(1).sum()
    return -(labels * logp).sum(1).sum()


if __name__ == "__main__":
    key = jax.random.PRNGKey(0)
    k1, k2, k3, k4 = jax.random.split(key, 4)

    # Module-spec shape: (batch_size, 360) angle bins.
    B, C = 2, 360
    preds = jax.random.normal(k1, (B, C), dtype=jnp.float32)
    labels = jax.nn.softmax(jax.random.normal(k2, (B, C), dtype=jnp.float32), axis=1)

    loss_mod = ViewpointLoss(mean=True)
    loss = loss_mod(preds, labels)            # tiny batch -> fused pure-JAX path
    jax.block_until_ready(loss)
    assert jnp.allclose(loss, _reference(preds, labels, True), rtol=1e-5, atol=1e-5)

    # Exercise the Pallas kernel: multi-block grid + ragged last tile + both modes.
    B2 = 40
    preds2 = jax.random.normal(k3, (B2, C), dtype=jnp.float32)
    labels2 = jax.nn.softmax(jax.random.normal(k4, (B2, C), dtype=jnp.float32), axis=1)
    for mean_flag in (True, False):
        got = viewpoint_loss(preds2, labels2, mean=mean_flag,
                             tile_batch=16, use_pallas=True)
        jax.block_until_ready(got)
        ref = _reference(preds2, labels2, mean_flag)
        assert jnp.allclose(got, ref, rtol=1e-5, atol=1e-5), (mean_flag, got, ref)

    # Single-block Pallas path (tb == B, full-extent block).
    got = viewpoint_loss(preds2, labels2, mean=True, use_pallas=True)
    jax.block_until_ready(got)
    assert jnp.allclose(got, _reference(preds2, labels2, True), rtol=1e-5, atol=1e-5)

    # bf16 inputs: halves HBM traffic; sub-extent tiles rounded to 16 sublanes.
    preds3 = preds2.astype(jnp.bfloat16)
    labels3 = labels2.astype(jnp.bfloat16)
    got = viewpoint_loss(preds3, labels3, mean=True,
                         tile_batch=16, use_pallas=True)
    jax.block_until_ready(got)
    ref = _reference(preds3, labels3, True)
    assert jnp.allclose(got, ref, rtol=1e-4, atol=1e-4), (got, ref)

    print("KERNEL_OK")
</pallas_src>

<mosaic_0001>
module attributes {stable_mosaic.version = 11 : i64} {
  func.func @_viewpoint_loss_kernel(%arg0: i32, %arg1: memref<16x360xf32, #tpu.memory_space<vmem>>, %arg2: memref<16x360xf32, #tpu.memory_space<vmem>>, %arg3: memref<1x8x128xf32, #tpu.memory_space<vmem>>) attributes {dimension_semantics = [#tpu.dimension_semantics<parallel>], iteration_bounds = array<i64: 3>, scalar_prefetch = 0 : i64, scratch_operands = 0 : i64, tpu.core_type = #tpu.core_type<tc>, window_params = [{transform_indices = @transform_0, window_bounds = array<i64: 16, 360>}, {transform_indices = @transform_1, window_bounds = array<i64: 16, 360>}, {transform_indices = @transform_2, window_bounds = array<i64: 1, 8, 128>}]} {
    %c0 = arith.constant 0 : index
    %c0_0 = arith.constant 0 : index
    %0 = vector.load %arg1[%c0, %c0_0] : memref<16x360xf32, #tpu.memory_space<vmem>>, vector<16x360xf32>
    %c0_1 = arith.constant 0 : index
    %c0_2 = arith.constant 0 : index
    %1 = vector.load %arg2[%c0_1, %c0_2] : memref<16x360xf32, #tpu.memory_space<vmem>>, vector<16x360xf32>
    %cst = arith.constant dense<0xFF800000> : vector<16xf32>
    %2 = vector.multi_reduction <maximumf>, %0, %cst [1] : vector<16x360xf32> to vector<16xf32>
    %3 = vector.shape_cast %2 : vector<16xf32> to vector<16x1xf32>
    %4 = vector.broadcast %3 : vector<16x1xf32> to vector<16x360xf32>
    %5 = arith.subf %0, %4 : vector<16x360xf32>
    %6 = math.exp %5 : vector<16x360xf32>
    %cst_3 = arith.constant dense<0.000000e+00> : vector<16xf32>
    %7 = vector.multi_reduction <add>, %6, %cst_3 [1] : vector<16x360xf32> to vector<16xf32>
    %8 = vector.shape_cast %7 : vector<16xf32> to vector<16x1xf32>
    %9 = math.log %8 : vector<16x1xf32>
    %10 = vector.broadcast %9 : vector<16x1xf32> to vector<16x360xf32>
    %11 = arith.subf %5, %10 : vector<16x360xf32>
    %12 = arith.mulf %1, %11 : vector<16x360xf32>
    %cst_4 = arith.constant dense<0.000000e+00> : vector<16xf32>
    %13 = vector.multi_reduction <add>, %12, %cst_4 [1] : vector<16x360xf32> to vector<16xf32>
    %14 = vector.shape_cast %13 : vector<16xf32> to vector<16x1xf32>
    %c16_i32 = arith.constant 16 : i32
    %15 = arith.muli %arg0, %c16_i32 : i32
    %16 = tpu.iota {dimensions = array<i32: 0>} : vector<16x1xi32>
    %17 = vector.broadcast %15 : i32 to vector<16x1xi32>
    %18 = arith.addi %17, %16 : vector<16x1xi32>
    %c40_i32 = arith.constant 40 : i32
    %19 = vector.broadcast %c40_i32 : i32 to vector<16x1xi32>
    %20 = arith.cmpi slt, %18, %19 : vector<16x1xi32>
    %cst_5 = arith.constant 0.000000e+00 : f32
    %21 = vector.broadcast %cst_5 : f32 to vector<16x1xf32>
    %22 = arith.select %20, %14, %21 : vector<16x1xi1>, vector<16x1xf32>
    %cst_6 = arith.constant dense<0.000000e+00> : vector<1xf32>
    %23 = vector.multi_reduction <add>, %22, %cst_6 [0] : vector<16x1xf32> to vector<1xf32>
    %24 = vector.shape_cast %23 : vector<1xf32> to vector<1x1xf32>
    %25 = vector.shape_cast %24 : vector<1x1xf32> to vector<1x1x1xf32>
    %26 = vector.shape_cast %25 : vector<1x1x1xf32> to vector<1x1x1xf32>
    %27 = vector.broadcast %26 : vector<1x1x1xf32> to vector<1x8x128xf32>
    %c0_7 = arith.constant 0 : index
    %c0_8 = arith.constant 0 : index
    %c0_9 = arith.constant 0 : index
    %28 = vector.load %arg3[%c0_7, %c0_8, %c0_9] : memref<1x8x128xf32, #tpu.memory_space<vmem>>, vector<1x8x128xf32>
    tpu.vector_store %arg3[%c0_7, %c0_8, %c0_9], %27 {strides = array<i32>} : memref<1x8x128xf32, #tpu.memory_space<vmem>>, vector<1x8x128xf32>,
    return
  }
  func.func @transform_0(%arg0: i32) -> (i32, i32) {
    %c0_i32 = arith.constant 0 : i32
    %c0_i32_0 = arith.constant 0 : i32
    return %arg0, %c0_i32 : i32, i32
  }
  func.func @transform_1(%arg0: i32) -> (i32, i32) {
    %c0_i32 = arith.constant 0 : i32
    %c0_i32_0 = arith.constant 0 : i32
    return %arg0, %c0_i32 : i32, i32
  }
  func.func @transform_2(%arg0: i32) -> (i32, i32, i32) {
    %c0_i32 = arith.constant 0 : i32
    %c0_i32_0 = arith.constant 0 : i32
    %c0_i32_1 = arith.constant 0 : i32
    return %arg0, %c0_i32, %c0_i32_0 : i32, i32, i32
  }
}

</mosaic_0001>

<llo_original>
// kernel: tpu_custom_call.1
$region0: #{tpu_custom_call.1}
  #allocation0 [shape = 'u32[]', space=smem, size = 0x4, offset = 0x4, fixed_abs, tag = 'smem constant byte address 0x4 - core index']
  #allocation1 [shape = 'u32[144,128]{1,0:T(1,128)}', space=vmem, size = 0x12000, scoped, tag = 'internal scratch']
  %s0 = inlined_call_operand.hbm [shape: f32[40,360], index: 0, kind: input, shape index: {}]
  %s1 = inlined_call_operand.hbm [shape: f32[40,360], index: 1, kind: input, shape index: {}]
  %s2 = inlined_call_operand.hbm [shape: f32[3,8,128], index: 2, kind: output, shape index: {}]
  %s3 = sld [smem:[#allocation0]]
  $region49: #{tpu_custom_call.1} parent=0
    _
  %s5 = ssub.s32 1, %s3
  %s6 = scalar_select 0, %s5, %s3
  $region1: #{tpu_custom_call.1} parent=0
    #allocation2 [shape = 'u8[49152]{0}', space=vmem, size = 0xc000, scoped, tag = 'input window, operand 0']
    #allocation3 [shape = 's32[2]{0}', space=sflag, size = 0x8, scoped, tag = 'scoped memory for tpu_custom_call.1']
    #allocation4 [shape = 's32[2]{0}', space=sflag, size = 0x8, scoped, tag = 'scoped memory for tpu_custom_call.1']
    #allocation5 [shape = 'u8[49152]{0}', space=vmem, size = 0xc000, scoped, tag = 'input window, operand 1']
    #allocation6 [shape = 's32[2]{0}', space=sflag, size = 0x8, scoped, tag = 'scoped memory for tpu_custom_call.1']
    #allocation7 [shape = 'u8[8192]{0}', space=vmem, size = 0x2000, scoped, tag = 'output window, operand 0']
    %7 = vsyncpa [#allocation3], 0
    %s8 = scalar_lea.sflag [#allocation3], 1
    %9 = vsyncpa %s8, 0
    %10 = vsyncpa [#allocation6], 0
    %s11 = scalar_lea.sflag [#allocation6], 1
    %12 = vsyncpa %s11, 0
    %13 = vsyncpa [#allocation4], 0
    %s14 = scalar_lea.sflag [#allocation4], 1
    %15 = vsyncpa %s14, 0
    loop: start=0, step=1, limit=5
    $region2: #{tpu_custom_call.1} parent=1 // loop_pre_header
      _
    $region3: #{tpu_custom_call.1} parent=1 // loop_header
      %s17 = sphi 0, %s21
      %p18 = scmp.ge.s32.totalorder %s17, 5
      %s27 = sphi 0, %s29
      %s30 = sphi 0, %s27
      %s31 = sphi 0, %s30
      %s47 = sphi 0, %s31
      %s53 = sphi 0, %s55
      %s56 = sphi 0, %s53
      %s57 = sphi 0, %s56
      %s73 = sphi 0, %s57
      %s79 = sphi 0, %s81
      %s82 = sphi 0, %s79
      %s83 = sphi 0, %s82
      %s99 = sphi 0, %s83
    $region4: #{tpu_custom_call.1} parent=1 // loop_header_branch
      %20 = sbr.rel (%p18) target = $region8
    $region5: #{tpu_custom_call.1} parent=1 // loop_body
      %s22 = ssub.s32 %s17, 1
      %s23 = ssub.s32 %s17, 2
      %s24 = sadd.s32 %s17, 1
      %s25 = ssub.s32 %s17, %s24
      %p26 = scmp.eq.s32.totalorder %s25, 0
      %s28 = sadd.s32 %s27, 1
      %s29 = scalar_select %p26, %s27, %s28
      %p32 = pneg %p26
      %p33 = scmp.eq.s32.totalorder %s17, 2
      %p34 = por %p32, %p33
      %p35 = scmp.ne.s32.totalorder %s27, %s30
      %p36 = scmp.eq.s32.totalorder %s17, 0
      %p37 = por %p35, %p36
      %p38 = scmp.ne.s32.totalorder %s27, %s30
      %p39 = scmp.eq.s32.totalorder %s22, 2
      %p40 = por %p38, %p39
      %p41 = scmp.ne.s32.totalorder %s30, %s31
      %p42 = scmp.eq.s32.totalorder %s22, 0
      %p43 = por %p41, %p42
      %p44 = scmp.ne.s32.totalorder %s30, %s31
      %p45 = scmp.eq.s32.totalorder %s23, 2
      %p46 = por %p44, %p45
      %p48 = scmp.ne.s32.totalorder %s31, %s47
      %p49 = scmp.eq.s32.totalorder %s23, 0
      %p50 = por %p48, %p49
      %s51 = ssub.s32 %s17, %s24
      %p52 = scmp.eq.s32.totalorder %s51, 0
      %s54 = sadd.s32 %s53, 1
      %s55 = scalar_select %p52, %s53, %s54
      %p58 = pneg %p52
      %p59 = scmp.eq.s32.totalorder %s17, 2
      %p60 = por %p58, %p59
      %p61 = scmp.ne.s32.totalorder %s53, %s56
      %p62 = scmp.eq.s32.totalorder %s17, 0
      %p63 = por %p61, %p62
      %p64 = scmp.ne.s32.totalorder %s53, %s56
      %p65 = scmp.eq.s32.totalorder %s22, 2
      %p66 = por %p64, %p65
      %p67 = scmp.ne.s32.totalorder %s56, %s57
      %p68 = scmp.eq.s32.totalorder %s22, 0
      %p69 = por %p67, %p68
      %p70 = scmp.ne.s32.totalorder %s56, %s57
      %p71 = scmp.eq.s32.totalorder %s23, 2
      %p72 = por %p70, %p71
      %p74 = scmp.ne.s32.totalorder %s57, %s73
      %p75 = scmp.eq.s32.totalorder %s23, 0
      %p76 = por %p74, %p75
      %s77 = ssub.s32 %s17, %s24
      %p78 = scmp.eq.s32.totalorder %s77, 0
      %s80 = sadd.s32 %s79, 1
      %s81 = scalar_select %p78, %s79, %s80
      %p84 = pneg %p78
      %p85 = scmp.eq.s32.totalorder %s17, 2
      %p86 = por %p84, %p85
      %p87 = scmp.ne.s32.totalorder %s79, %s82
      %p88 = scmp.eq.s32.totalorder %s17, 0
      %p89 = por %p87, %p88
      %p90 = scmp.ne.s32.totalorder %s79, %s82
      %p91 = scmp.eq.s32.totalorder %s22, 2
      %p92 = por %p90, %p91
      %p93 = scmp.ne.s32.totalorder %s82, %s83
      %p94 = scmp.eq.s32.totalorder %s22, 0
      %p95 = por %p93, %p94
      %p96 = scmp.ne.s32.totalorder %s82, %s83
      %p97 = scmp.eq.s32.totalorder %s23, 2
      %p98 = por %p96, %p97
      %p100 = scmp.ne.s32.totalorder %s83, %s99
      %p101 = scmp.eq.s32.totalorder %s23, 0
      %p102 = por %p100, %p101
      %p103 = scmp.le.s32.totalorder 1, %s17
      %p104 = scmp.lt.s32.totalorder %s17, 4
      %p105 = pnand %p103, %p104
      %p106 = pneg %p105
      // Predicated region
      $region9: #{tpu_custom_call.1} parent=5 // pred_check
        _
      $region10: #{tpu_custom_call.1} parent=5 // pred_check_branch
        %108 = sbr.rel (%p105) target = $region12
      $region11: #{tpu_custom_call.1} parent=5 // pred_region
        %s109 = ssub.s32 %s17, 1
      $region12: #{tpu_custom_call.1} parent=5 // pred_fallthru
        _
      %p110 = scmp.lt.s32.totalorder %s17, 3
      // Predicated region
      $region13: #{tpu_custom_call.1} parent=5 // pred_check
        %p111 = pneg %p110
      $region14: #{tpu_custom_call.1} parent=5 // pred_check_branch
        %113 = sbr.rel (%p111) target = $region16
      $region15: #{tpu_custom_call.1} parent=5 // pred_region
        // Predicated region
        $region17: #{tpu_custom_call.1} parent=15 // pred_check
          %p114 = pneg %p37
        $region18: #{tpu_custom_call.1} parent=15 // pred_check_branch
          %116 = sbr.rel (%p114) target = $region20
        $region19: #{tpu_custom_call.1} parent=15 // pred_region
          %s117 = sand.u32 %s27, 1
          %s118 = scalar_lea.sflag [#allocation3], %s117
          %s119 = sand.u32 %s27, 1
          %s120 = smul.addr %s119, 48
          %s121 = scalar_lea.vmem [#allocation2], %s120
          %s122 = smul.u32 2, %s17
          %s123 = ssub.s32 5, %s122
          %p124 = scmp.lt.s32.totalorder %s123, 2
          %s125 = scalar_select %p124, %s123, 2
          %s126 = smul.u32 128, %s125
          %s127 = smul.u32 %s126, 3
          %s129 = ssub.s32 768, %s127
          %130 = vsyncadd %s118, %s129
          %p131 = scmp.ne.s32.totalorder 0, %s127
          %s132 = smul.addr %s122, 3
          %s133 = smul.addr %s132, 128
          %s134 = scalar_lea.hbm %s0, %s133
          %s135 = smul.u32 24, %s125
          %s136 = sshll.u32 %s121, 4
          %s137 = int_to_ptr.vmem [resolvable:$true] %s136
          %s138 = sshll.u32 %s135, 4
          %142 = dma.hbm_to_vmem [thread:$0]  (%p131), %s134, %s138, %s137, %s118, 384, 384, 24
        $region20: #{tpu_custom_call.1} parent=15 // pred_fallthru
          _
        // Predicated region
        $region21: #{tpu_custom_call.1} parent=15 // pred_check
          %p143 = pneg %p63
        $region22: #{tpu_custom_call.1} parent=15 // pred_check_branch
          %145 = sbr.rel (%p143) target = $region24
        $region23: #{tpu_custom_call.1} parent=15 // pred_region
          %s146 = sand.u32 %s53, 1
          %s147 = scalar_lea.sflag [#allocation6], %s146
          %s148 = sand.u32 %s53, 1
          %s149 = smul.addr %s148, 48
          %s150 = scalar_lea.vmem [#allocation5], %s149
          %s151 = smul.u32 2, %s17
          %s152 = ssub.s32 5, %s151
          %p153 = scmp.lt.s32.totalorder %s152, 2
          %s154 = scalar_select %p153, %s152, 2
          %s155 = smul.u32 128, %s154
          %s156 = smul.u32 %s155, 3
          %s158 = ssub.s32 768, %s156
          %159 = vsyncadd %s147, %s158
          %p160 = scmp.ne.s32.totalorder 0, %s156
          %s161 = smul.addr %s151, 3
          %s162 = smul.addr %s161, 128
          %s163 = scalar_lea.hbm %s1, %s162
          %s164 = smul.u32 24, %s154
          %s165 = sshll.u32 %s150, 4
          %s166 = int_to_ptr.vmem [resolvable:$true] %s165
          %s167 = sshll.u32 %s164, 4
          %171 = dma.hbm_to_vmem [thread:$0]  (%p160), %s163, %s167, %s166, %s147, 384, 384, 24
        $region24: #{tpu_custom_call.1} parent=15 // pred_fallthru
          _
      $region16: #{tpu_custom_call.1} parent=5 // pred_fallthru
        _
      %p172 = scmp.le.s32.totalorder 1, %s17
      %p173 = scmp.lt.s32.totalorder %s17, 4
      %p174 = pnand %p172, %p173
      %p175 = pneg %p174
      // Predicated region
      $region25: #{tpu_custom_call.1} parent=5 // pred_check
        _
      $region26: #{tpu_custom_call.1} parent=5 // pred_check_branch
        %177 = sbr.rel (%p174) target = $region28
      $region27: #{tpu_custom_call.1} parent=5 // pred_region
        %s178 = ssub.s32 %s17, 1
        %s179 = sand.u32 %s30, 1
        %s180 = scalar_lea.sflag [#allocation3], %s179
        %s181 = sand.u32 %s30, 1
        %s182 = smul.addr %s181, 48
        %s183 = scalar_lea.vmem [#allocation2], %s182
        // Predicated region
        $region29: #{tpu_custom_call.1} parent=27 // pred_check
          %p184 = pneg %p43
        $region30: #{tpu_custom_call.1} parent=27 // pred_check_branch
          %186 = sbr.rel (%p184) target = $region32
        $region31: #{tpu_custom_call.1} parent=27 // pred_region
          %187 = dma.done %s180, 768
        $region32: #{tpu_custom_call.1} parent=27 // pred_fallthru
          _
        %s188 = sand.u32 %s56, 1
        %s189 = scalar_lea.sflag [#allocation6], %s188
        %s190 = sand.u32 %s56, 1
        %s191 = smul.addr %s190, 48
        %s192 = scalar_lea.vmem [#allocation5], %s191
        // Predicated region
        $region33: #{tpu_custom_call.1} parent=27 // pred_check
          %p193 = pneg %p69
        $region34: #{tpu_custom_call.1} parent=27 // pred_check_branch
          %195 = sbr.rel (%p193) target = $region36
        $region35: #{tpu_custom_call.1} parent=27 // pred_region
          %196 = dma.done %s189, 768
        $region36: #{tpu_custom_call.1} parent=27 // pred_fallthru
          _
        %s197 = sand.u32 %s30, 1
        %s198 = scalar_lea.sflag [#allocation3], %s197
        %s199 = sand.u32 %s30, 1
        %s200 = smul.addr %s199, 48
        %s201 = scalar_lea.vmem [#allocation2], %s200
        %p202 = pneg %p43
        %p203 = pneg %p40
        %s204 = sand.u32 %s56, 1
        %s205 = scalar_lea.sflag [#allocation6], %s204
        %s206 = sand.u32 %s56, 1
        %s207 = smul.addr %s206, 48
        %s208 = scalar_lea.vmem [#allocation5], %s207
        %p209 = pneg %p69
        %p210 = pneg %p66
        %p211 = pneg %p95
        %p212 = pneg %p92
        %s213 = sand.u32 %s82, 1
        %s214 = scalar_lea.sflag [#allocation4], %s213
        %s215 = sand.u32 %s82, 1
        %s216 = smul.addr %s215, 8
        %s217 = scalar_lea.vmem [#allocation7], %s216
        %s218 = smul.u32 2, %s22
        %s219 = ssub.s32 5, %s218
        %p220 = scmp.lt.s32.totalorder %s219, 2
        %s221 = scalar_select %p220, %s219, 2
        %s222 = smul.u32 128, %s221
        %s223 = smul.u32 %s222, 3
        %s224 = smul.u32 2, %s22
        %s225 = ssub.s32 5, %s224
        %p226 = scmp.lt.s32.totalorder %s225, 2
        %s227 = scalar_select %p226, %s225, 2
        %s228 = smul.u32 128, %s227
        %s229 = smul.u32 %s228, 3
        %v230 = vld [vmem:[%s183] sm:$0xff]
        %v231 = vld [vmem:[%s183 + $0x8] sm:$0xff]
        %v232 = vld [vmem:[%s183 + $0x10] sm:$0xff]
        %v233 = vld [vmem:[%s183 + $0x18] sm:$0xff]
        %v234 = vld [vmem:[%s183 + $0x20] sm:$0xff]
        %v235 = vld [vmem:[%s183 + $0x28] sm:$0xff]
        %v236 = vld [vmem:[%s192] sm:$0xff]
        %v237 = vld [vmem:[%s192 + $0x8] sm:$0xff]
        %v238 = vld [vmem:[%s192 + $0x10] sm:$0xff]
        %v239 = vld [vmem:[%s192 + $0x18] sm:$0xff]
        %v240 = vld [vmem:[%s192 + $0x20] sm:$0xff]
        %v241 = vld [vmem:[%s192 + $0x28] sm:$0xff]
        %vm242 = vcmask 850944
        %v243 = vsel %vm242, %v232, -inf
        %v244 = vmax.f32 %v230, %v243
        %v245 = vmax.f32 %v244, %v231
        %246 = vmax.xlane.f32.xlu0 %v245
        %v247 = vpop.xlane.xlu0 %246
        %v248 = vsel %vm242, %v235, -inf
        %v249 = vmax.f32 %v233, %v248
        %v250 = vmax.f32 %v249, %v234
        %251 = vmax.xlane.f32.xlu0 %v250
        %v252 = vpop.xlane.xlu0 %251
        %v253 = vsub.f32 %v230, %v247
        %v254 = vsub.f32 %v231, %v247
        %v255 = vsub.f32 %v232, %v247
        %v256 = vsub.f32 %v233, %v252
        %v257 = vsub.f32 %v234, %v252
        %v258 = vsub.f32 %v235, %v252
        %v259 = vmul.f32 %v253, 1.442695
        %v260 = vpow.pop %v259
        %v261 = vmul.f32 %v254, 1.442695
        %v262 = vpow.pop %v261
        %v263 = vmul.f32 %v255, 1.442695
        %v264 = vpow.pop %v263
        %v265 = vmul.f32 %v256, 1.442695
        %v266 = vpow.pop %v265
        %v267 = vmul.f32 %v257, 1.442695
        %v268 = vpow.pop %v267
        %v269 = vmul.f32 %v258, 1.442695
        %v270 = vpow.pop %v269
        %v271 = vadd.f32 %v260, %v262
        %v272 = vsel %vm242, %v264, 0.0
        %v273 = vadd.f32 %v271, %v272
        %274 = vadd.xlane.f32.xlu0 %v273
        %v275 = vpop.xlane.xlu0 %274
        %v276 = vadd.f32 %v266, %v268
        %v277 = vsel %vm242, %v270, 0.0
        %v278 = vadd.f32 %v276, %v277
        %279 = vadd.xlane.f32.xlu0 %v278
        %v280 = vpop.xlane.xlu0 %279
        %v281 = vlog2.pop %v275
        %v282 = vmul.f32 %v281, 0.6931472
        %v283 = vlog2.pop %v280
        %v284 = vmul.f32 %v283, 0.6931472
        %v285 = vsub.f32 %v253, %v282
        %v286 = vsub.f32 %v254, %v282
        %v287 = vsub.f32 %v255, %v282
        %v288 = vsub.f32 %v256, %v284
        %v289 = vsub.f32 %v257, %v284
        %v290 = vsub.f32 %v258, %v284
        %v291 = vmul.f32 %v236, %v285
        %v292 = vmul.f32 %v237, %v286
        %v293 = vmul.f32 %v238, %v287
        %v294 = vmul.f32 %v239, %v288
        %v295 = vmul.f32 %v240, %v289
        %v296 = vmul.f32 %v241, %v290
        %v297 = vadd.f32 %v291, %v292
        %v298 = vsel %vm242, %v293, 0.0
        %v299 = vadd.f32 %v297, %v298
        %300 = vadd.xlane.f32.xlu0 %v299
        %v301 = vpop.xlane.xlu0 %300
        %v302 = vadd.f32 %v294, %v295
        %v303 = vsel %vm242, %v296, 0.0
        %v304 = vadd.f32 %v302, %v303
        %305 = vadd.xlane.f32.xlu0 %v304
        %v306 = vpop.xlane.xlu0 %305
        %s307 = smul.u32 %s22, 16
        %v308 = vlaneseq
        %v309 = vshrl.u32 %v308, 7
        %v310 = vadd.s32 %v309, 8
        %v311 = vstv %s307
        %v312 = vadd.s32 %v311, %v309
        %v313 = vadd.s32 %v311, %v310
        %vm314 = vcmp.lt.s32.totalorder %v312, 40
        %vm315 = vcmp.lt.s32.totalorder %v313, 40
        %v316 = vsel %vm314, %v301, 0.0
        %v317 = vsel %vm315, %v306, 0.0
        %v318 = vadd.f32 %v316, %v317
        %v319 = vrot.slane %v318, 4
        %v320 = vadd.f32 %v318, %v319
        %v321 = vrot.slane %v320, 2
        %v322 = vadd.f32 %v320, %v321
        %v323 = vrot.slane %v322, 1
        %v324 = vadd.f32 %v322, %v323
        %325 = vst [vmem:[%s217] sm:$0xff] %v324
        %s326 = sand.u32 %s82, 1
        %s327 = scalar_lea.sflag [#allocation4], %s326
        %s328 = sand.u32 %s82, 1
        %s329 = smul.addr %s328, 8
        %s330 = scalar_lea.vmem [#allocation7], %s329
        // Predicated region
        $region37: #{tpu_custom_call.1} parent=27 // pred_check
          %p331 = pneg %p92
        $region38: #{tpu_custom_call.1} parent=27 // pred_check_branch
          %333 = sbr.rel (%p331) target = $region40
        $region39: #{tpu_custom_call.1} parent=27 // pred_region
          %s335 = ssub.s32 128, 128
          %336 = vsyncadd %s327, %s335
          %s337 = smul.addr %s22, 128
          %s338 = scalar_lea.hbm %s2, %s337
          %s340 = sshll.u32 %s330, 4
          %s341 = int_to_ptr.vmem [resolvable:$true] %s340
          %343 = dma.vmem_to_hbm [thread:$0]  %s341, 128, %s338, %s327
        $region40: #{tpu_custom_call.1} parent=27 // pred_fallthru
          _
      $region28: #{tpu_custom_call.1} parent=5 // pred_fallthru
        _
      %p344 = scmp.le.s32.totalorder 2, %s17
      // Predicated region
      $region41: #{tpu_custom_call.1} parent=5 // pred_check
        %p345 = pneg %p344
      $region42: #{tpu_custom_call.1} parent=5 // pred_check_branch
        %347 = sbr.rel (%p345) target = $region44
      $region43: #{tpu_custom_call.1} parent=5 // pred_region
        %s348 = ssub.s32 %s17, 2
        // Predicated region
        $region45: #{tpu_custom_call.1} parent=43 // pred_check
          %p349 = pneg %p98
        $region46: #{tpu_custom_call.1} parent=43 // pred_check_branch
          %351 = sbr.rel (%p349) target = $region48
        $region47: #{tpu_custom_call.1} parent=43 // pred_region
          %s352 = sand.u32 %s83, 1
          %s353 = scalar_lea.sflag [#allocation4], %s352
          %s354 = sand.u32 %s83, 1
          %s355 = smul.addr %s354, 8
          %s356 = scalar_lea.vmem [#allocation7], %s355
          %357 = dma.done %s353, 128
        $region48: #{tpu_custom_call.1} parent=43 // pred_fallthru
          _
      $region44: #{tpu_custom_call.1} parent=5 // pred_fallthru
        _
    $region6: #{tpu_custom_call.1} parent=1 // loop_footer
      %s21 = sadd.s32 1, %s17
    $region7: #{tpu_custom_call.1} parent=1 // loop_footer_branch
      %16 = sbr.rel target = $region3
    $region8: #{tpu_custom_call.1} parent=1 // loop_exit
      _
    %358 = vsyncpa [#allocation3], 1
    %s359 = scalar_lea.sflag [#allocation3], 1
    %360 = vsyncpa %s359, 1
    %361 = vsyncpa [#allocation6], 1
    %s362 = scalar_lea.sflag [#allocation6], 1
    %363 = vsyncpa %s362, 1
    %364 = vsyncpa [#allocation4], 1
    %s365 = scalar_lea.sflag [#allocation4], 1
    %366 = vsyncpa %s365, 1

</llo_original>
